<compile_context>
chip_gen: v5e
topology: v5e:2x2
jax: 0.10.0
libtpu: 0.0.40
codegen_flags: <defaults>
</compile_context>

<pallas_src>
import jax
import jax.numpy as jnp
from jax import lax
from jax.experimental import pallas as pl
from jax.experimental.pallas import tpu as pltpu


_LANES = 128
_ROW_TILE_CAP = 64            # rows (= samples * channels) per tile
_X_TILE_BUDGET = 8 << 20      # bytes per x input buffer (x2 when double-buffered)


def _imagenetx_kernel(x_ref, sel_ref, w_ref, b_ref, out_ref, acc_ref):
    # x_ref:   (T_R, THW)   rows = (sample, channel) pairs, spatial on lanes
    # sel_ref: (TB, T_R)    sel[s, r] = 1.0 iff row r belongs to sample s
    # w_ref:   (T_R, Kpad)  folded head weights, row r -> w_eff[r % C]
    # b_ref:   (1, Kpad)    folded head bias
    # out_ref: (TB, Kpad)   padded masked logits for this row tile
    # acc_ref: (T_R, 128)   f32 lane-partial accumulator (VMEM scratch)
    j = pl.program_id(1)

    @pl.when(j == 0)
    def _():
        acc_ref[...] = jnp.zeros_like(acc_ref)

    t_rows, thw = x_ref.shape
    nchunks = thw // _LANES          # wrapper guarantees thw % 128 == 0

    # Streaming spatial sum: pure VPU adds into a lane-partial accumulator
    # kept in vregs (fori carry); the single cross-lane (XLU) reduce and the
    # tiny head matmul are deferred to the finalize step.
    if nchunks <= 16:
        part = jnp.zeros((t_rows, _LANES), jnp.float32)
        for f in range(nchunks):
            part = part + x_ref[:, f * _LANES:(f + 1) * _LANES].astype(jnp.float32)
    else:
        def body(f, part):
            off = pl.multiple_of(f * _LANES, _LANES)
            return part + x_ref[:, pl.ds(off, _LANES)].astype(jnp.float32)

        part = lax.fori_loop(0, nchunks, body,
                             jnp.zeros((t_rows, _LANES), jnp.float32),
                             unroll=8)
    acc_ref[...] += part

    @pl.when(j == pl.num_programs(1) - 1)
    def _():
        pooled = jnp.sum(acc_ref[...], axis=-1, keepdims=True)        # (T_R, 1)
        scaled = pooled * w_ref[...]                                   # (T_R, Kpad)
        logits = jnp.dot(sel_ref[...], scaled,
                         preferred_element_type=jnp.float32)           # (TB, Kpad)
        out_ref[...] = (logits + b_ref[...]).astype(out_ref.dtype)


def _pick_row_tile(n, c):
    """Returns (rows per tile, samples per tile, padded batch size)."""
    rows = n * c
    if rows <= _ROW_TILE_CAP:
        # Single row tile covering all rows (block == full dim bypasses the
        # 8-sublane divisibility rule).  Only tiny batches hit this path, so
        # the single-tile "parallel" axis is acceptable.
        return rows, n, n
    for tb in (32, 16, 8):           # samples per tile: multiple of 8, divides N
        if n % tb == 0 and tb * c <= max(_ROW_TILE_CAP, 8 * c):
            return tb * c, tb, n
    # Ragged batch (N not a multiple of 8): pad the batch with zero samples.
    # TODO(synk): this host-side batch pad costs one extra HBM copy of x; a
    # masked ragged last row tile would avoid it.
    n_pad = pl.cdiv(n, 8) * 8
    return 8 * c, 8, n_pad


def _pick_spatial_tile(hw, rows, itemsize):
    """Largest multiple-of-128 divisor of hw whose x tile fits the budget."""
    max_elems = max(_LANES, _X_TILE_BUDGET // (rows * itemsize))
    best = _LANES
    t = _LANES
    while t <= min(hw, max_elems):
        if hw % t == 0:
            best = t
        t += _LANES
    return best


@jax.jit
def imagenetx_forward(x_nchw, mean, std, w, b, mask_idx):
    """x_nchw: (N, C, H, W).  Returns logits[:, mask] with shape (N, |mask|)."""
    n, c, h, wdim = x_nchw.shape
    hw = h * wdim
    m = int(mask_idx.shape[0])

    # ---- algebraic folding (trace time, tiny) -----------------------------
    # logits[:, mask] = mean_s((x - mean)/std) @ w[:, mask] + b[mask]
    #                 = sum_s(x) @ (w[:, mask] / (std * HW))
    #                   + (b[mask] - (mean/std) @ w[:, mask])
    w_m = jnp.take(w, mask_idx, axis=1).astype(jnp.float32)       # (C, M)
    b_m = jnp.take(b, mask_idx, axis=0).astype(jnp.float32)       # (M,)
    mean_f = mean.astype(jnp.float32)
    std_f = std.astype(jnp.float32)
    w_eff = w_m / (std_f[:, None] * jnp.float32(hw))              # (C, M)
    b_eff = b_m - (mean_f / std_f) @ w_m                          # (M,)

    k_pad = max(_LANES, pl.cdiv(m, _LANES) * _LANES)              # lane-dense out
    w_eff = jnp.pad(w_eff, ((0, 0), (0, k_pad - m)))              # (C, Kpad)
    b_eff = jnp.pad(b_eff, (0, k_pad - m)).reshape(1, k_pad)      # (1, Kpad)

    # ---- layout: dense rows (N*C, HW), spatial on lanes -------------------
    t_rows, tb, n_pad = _pick_row_tile(n, c)
    x_rows = x_nchw.reshape(n * c, hw)
    if n_pad != n:
        x_rows = jnp.pad(x_rows, ((0, (n_pad - n) * c), (0, 0)))

    if hw % _LANES != 0:
        # TODO(synk): host-side spatial zero-pad costs one extra HBM copy of
        # x; only hit when H*W is not 128-aligned (never for typical ImageNet
        # shapes).  Zero lanes do not change the folded spatial sum.
        hw_p = pl.cdiv(hw, _LANES) * _LANES
        x_rows = jnp.pad(x_rows, ((0, 0), (0, hw_p - hw)))
    else:
        hw_p = hw

    itemsize = x_rows.dtype.itemsize
    thw = _pick_spatial_tile(hw_p, t_rows, itemsize)
    grid = (n_pad * c // t_rows, hw_p // thw)

    # Folded-head constants in the row layout.
    sel = jnp.repeat(jnp.eye(tb, dtype=jnp.float32), c, axis=1)   # (TB, T_R)
    w_row = jnp.tile(w_eff, (tb, 1))                              # (T_R, Kpad)

    cost = pl.CostEstimate(
        flops=int(n_pad) * c * hw_p + 2 * int(n_pad) * t_rows * k_pad,
        transcendentals=0,
        bytes_accessed=x_rows.size * itemsize
        + (sel.size + w_row.size + b_eff.size + n_pad * k_pad) * 4,
    )

    out_padded = pl.pallas_call(
        _imagenetx_kernel,
        out_shape=jax.ShapeDtypeStruct((n_pad, k_pad), jnp.float32),
        grid_spec=pltpu.PrefetchScalarGridSpec(
            num_scalar_prefetch=0,
            grid=grid,
            in_specs=[
                pl.BlockSpec((t_rows, thw), lambda i, j: (i, j)),     # x rows
                pl.BlockSpec((tb, t_rows), lambda i, j: (0, 0)),      # sel
                pl.BlockSpec((t_rows, k_pad), lambda i, j: (0, 0)),   # folded W
                pl.BlockSpec((1, k_pad), lambda i, j: (0, 0)),        # folded b
            ],
            out_specs=pl.BlockSpec((tb, k_pad), lambda i, j: (i, 0)),
            scratch_shapes=[pltpu.VMEM((t_rows, _LANES), jnp.float32)],
        ),
        compiler_params=pltpu.CompilerParams(
            dimension_semantics=("parallel", "arbitrary"),
            vmem_limit_bytes=32 << 20),
        cost_estimate=cost,
    )(x_rows, sel, w_row, b_eff)

    # Strip batch/lane padding -> masked logits (N, |mask|).
    return out_padded[:n, :m]


if __name__ == "__main__":
    # Small shapes consistent with the forward: batch=2, channels=4,
    # spatial=16x16, num_classes=32, masked subset of 8 classes.
    N, C, H, W = 2, 4, 16, 16
    K = 32

    key = jax.random.PRNGKey(0)
    kx, kw, kb = jax.random.split(key, 3)

    x = jax.random.normal(kx, (N, C, H, W), dtype=jnp.float32)

    # Per-channel "normalize" parameters (ImageNet-style, extended to C=4).
    mean = jnp.array([0.485, 0.456, 0.406, 0.450], dtype=jnp.float32)
    std = jnp.array([0.229, 0.224, 0.225, 0.230], dtype=jnp.float32)

    # Deterministic synthetic classifier head.
    # TODO(synk): the wrapped external torch backbone is represented by a
    # global-average-pool + linear head; its normalize/mask are folded above.
    w = jax.random.normal(kw, (C, K), dtype=jnp.float32) * 0.1
    b = jax.random.normal(kb, (K,), dtype=jnp.float32) * 0.01

    # ImageNet-X style class mask (fixed subset of class indices).
    mask_idx = jnp.array([1, 3, 5, 8, 13, 21, 27, 30], dtype=jnp.int32)

    out = imagenetx_forward(x, mean, std, w, b, mask_idx)
    out = jax.block_until_ready(out)

    # Pure-JAX reference of the original (unfolded) semantics.
    xn_ref = (x - mean[None, :, None, None]) / std[None, :, None, None]
    pooled_ref = jnp.mean(xn_ref, axis=(2, 3))
    logits_ref = pooled_ref @ w + b
    ref = logits_ref[:, mask_idx]
    assert out.shape == (N, mask_idx.shape[0])
    assert jnp.allclose(out, ref, atol=1e-5, rtol=1e-5)

    print("KERNEL_OK")
</pallas_src>

<mosaic_0001>
module attributes {stable_mosaic.version = 11 : i64} {
  func.func @_imagenetx_kernel(%arg0: i32, %arg1: i32, %arg2: memref<8x256xf32, #tpu.memory_space<vmem>>, %arg3: memref<2x8xf32, #tpu.memory_space<vmem>>, %arg4: memref<8x128xf32, #tpu.memory_space<vmem>>, %arg5: memref<1x128xf32, #tpu.memory_space<vmem>>, %arg6: memref<2x128xf32, #tpu.memory_space<vmem>>, %arg7: memref<8x128xf32, #tpu.memory_space<vmem>>) attributes {dimension_semantics = [#tpu.dimension_semantics<parallel>, #tpu.dimension_semantics<arbitrary>], iteration_bounds = array<i64: 1, 1>, scalar_prefetch = 0 : i64, scratch_operands = 1 : i64, tpu.core_type = #tpu.core_type<tc>, window_params = [{transform_indices = @transform_0, window_bounds = array<i64: 8, 256>}, {pipeline_mode = #tpu.pipeline_mode<synchronous>, transform_indices = @transform_1, window_bounds = array<i64: 2, 8>}, {pipeline_mode = #tpu.pipeline_mode<synchronous>, transform_indices = @transform_2, window_bounds = array<i64: 8, 128>}, {pipeline_mode = #tpu.pipeline_mode<synchronous>, transform_indices = @transform_3, window_bounds = array<i64: 1, 128>}, {transform_indices = @transform_4, window_bounds = array<i64: 2, 128>}]} {
    %c0_i32 = arith.constant 0 : i32
    %0 = arith.cmpi eq, %arg1, %c0_i32 : i32
    %1 = arith.extui %0 : i1 to i32
    %c0_i32_0 = arith.constant 0 : i32
    %2 = arith.cmpi ne, %1, %c0_i32_0 : i32
    scf.if %2 {
      %cst_9 = arith.constant 0.000000e+00 : f32
      %14 = vector.broadcast %cst_9 : f32 to vector<8x128xf32>
      %c0_10 = arith.constant 0 : index
      %c0_11 = arith.constant 0 : index
      %15 = vector.load %arg7[%c0_10, %c0_11] : memref<8x128xf32, #tpu.memory_space<vmem>>, vector<8x128xf32>
      tpu.vector_store %arg7[%c0_10, %c0_11], %14 {strides = array<i32>} : memref<8x128xf32, #tpu.memory_space<vmem>>, vector<8x128xf32>,
    } else {
    }
    %cst = arith.constant 0.000000e+00 : f32
    %3 = vector.broadcast %cst : f32 to vector<8x128xf32>
    %c0 = arith.constant 0 : index
    %c0_1 = arith.constant 0 : index
    %4 = vector.load %arg2[%c0, %c0_1] : memref<8x256xf32, #tpu.memory_space<vmem>>, vector<8x128xf32>
    %5 = arith.addf %3, %4 : vector<8x128xf32>
    %c0_2 = arith.constant 0 : index
    %c128 = arith.constant 128 : index
    %6 = vector.load %arg2[%c0_2, %c128] : memref<8x256xf32, #tpu.memory_space<vmem>>, vector<8x128xf32>
    %7 = arith.addf %5, %6 : vector<8x128xf32>
    %c0_3 = arith.constant 0 : index
    %c0_4 = arith.constant 0 : index
    %8 = vector.load %arg7[%c0_3, %c0_4] : memref<8x128xf32, #tpu.memory_space<vmem>>, vector<8x128xf32>
    %9 = arith.addf %8, %7 : vector<8x128xf32>
    %c0_5 = arith.constant 0 : index
    %c0_6 = arith.constant 0 : index
    %10 = vector.load %arg7[%c0_5, %c0_6] : memref<8x128xf32, #tpu.memory_space<vmem>>, vector<8x128xf32>
    tpu.vector_store %arg7[%c0_5, %c0_6], %9 {strides = array<i32>} : memref<8x128xf32, #tpu.memory_space<vmem>>, vector<8x128xf32>,
    %c0_i32_7 = arith.constant 0 : i32
    %11 = arith.cmpi eq, %arg1, %c0_i32_7 : i32
    %12 = arith.extui %11 : i1 to i32
    %c0_i32_8 = arith.constant 0 : i32
    %13 = arith.cmpi ne, %12, %c0_i32_8 : i32
    scf.if %13 {
      %c0_9 = arith.constant 0 : index
      %c0_10 = arith.constant 0 : index
      %14 = vector.load %arg7[%c0_9, %c0_10] : memref<8x128xf32, #tpu.memory_space<vmem>>, vector<8x128xf32>
      %cst_11 = arith.constant dense<0.000000e+00> : vector<8xf32>
      %15 = vector.multi_reduction <add>, %14, %cst_11 [1] : vector<8x128xf32> to vector<8xf32>
      %16 = vector.shape_cast %15 : vector<8xf32> to vector<8x1xf32>
      %c0_12 = arith.constant 0 : index
      %c0_13 = arith.constant 0 : index
      %17 = vector.load %arg4[%c0_12, %c0_13] : memref<8x128xf32, #tpu.memory_space<vmem>>, vector<8x128xf32>
      %18 = vector.broadcast %16 : vector<8x1xf32> to vector<8x128xf32>
      %19 = arith.mulf %18, %17 : vector<8x128xf32>
      %c0_14 = arith.constant 0 : index
      %c0_15 = arith.constant 0 : index
      %20 = vector.load %arg3[%c0_14, %c0_15] : memref<2x8xf32, #tpu.memory_space<vmem>>, vector<2x8xf32>
      %cst_16 = arith.constant dense<0.000000e+00> : vector<2x128xf32>
      %21 = tpu.matmul %20, %19, %cst_16 {dimension_numbers = #tpu.dot_dimension_numbers<[1], [0], [0], [1], [0, 0, 1, 1], [], []>} : vector<2x8xf32>, vector<8x128xf32>, vector<2x128xf32> -> vector<2x128xf32>
      %c0_17 = arith.constant 0 : index
      %c0_18 = arith.constant 0 : index
      %22 = vector.load %arg5[%c0_17, %c0_18] : memref<1x128xf32, #tpu.memory_space<vmem>>, vector<1x128xf32>
      %23 = vector.broadcast %22 : vector<1x128xf32> to vector<2x128xf32>
      %24 = arith.addf %21, %23 : vector<2x128xf32>
      %c0_19 = arith.constant 0 : index
      %c0_20 = arith.constant 0 : index
      %25 = vector.load %arg6[%c0_19, %c0_20] : memref<2x128xf32, #tpu.memory_space<vmem>>, vector<2x128xf32>
      tpu.vector_store %arg6[%c0_19, %c0_20], %24 {strides = array<i32>} : memref<2x128xf32, #tpu.memory_space<vmem>>, vector<2x128xf32>,
    } else {
    }
    return
  }
  func.func @transform_0(%arg0: i32, %arg1: i32) -> (i32, i32) {
    %c0_i32 = arith.constant 0 : i32
    return %arg0, %arg1 : i32, i32
  }
  func.func @transform_1(%arg0: i32, %arg1: i32) -> (i32, i32) {
    %c0_i32 = arith.constant 0 : i32
    %c0_i32_0 = arith.constant 0 : i32
    %c0_i32_1 = arith.constant 0 : i32
    return %c0_i32, %c0_i32_0 : i32, i32
  }
  func.func @transform_2(%arg0: i32, %arg1: i32) -> (i32, i32) {
    %c0_i32 = arith.constant 0 : i32
    %c0_i32_0 = arith.constant 0 : i32
    %c0_i32_1 = arith.constant 0 : i32
    return %c0_i32, %c0_i32_0 : i32, i32
  }
  func.func @transform_3(%arg0: i32, %arg1: i32) -> (i32, i32) {
    %c0_i32 = arith.constant 0 : i32
    %c0_i32_0 = arith.constant 0 : i32
    %c0_i32_1 = arith.constant 0 : i32
    return %c0_i32, %c0_i32_0 : i32, i32
  }
  func.func @transform_4(%arg0: i32, %arg1: i32) -> (i32, i32) {
    %c0_i32 = arith.constant 0 : i32
    %c0_i32_0 = arith.constant 0 : i32
    return %arg0, %c0_i32 : i32, i32
  }
}

</mosaic_0001>

<llo_original>
// kernel: imagenetx_forward.1
$region0: #{imagenetx_forward.1}
  #allocation0 [shape = 'u32[]', space=smem, size = 0x4, offset = 0x4, fixed_abs, tag = 'smem constant byte address 0x4 - core index']
  #allocation1 [shape = 'u32[72,128]{1,0:T(1,128)}', space=vmem, size = 0x9000, scoped, tag = 'internal scratch']
  #allocation2 [shape = 'f32[8,128]{1,0:T(8,128)}', space=vmem, size = 0x1000, scoped, tag = 'scratch operand']
  %s0 = inlined_call_operand.vmem [shape: f32[8,256], index: 0, kind: input, shape index: {}]
  %s1 = inlined_call_operand.vmem [shape: f32[2,8], index: 1, kind: input, shape index: {}]
  %s2 = inlined_call_operand.vmem [shape: f32[8,128], index: 2, kind: input, shape index: {}]
  %s3 = inlined_call_operand.vmem [shape: f32[1,128], index: 3, kind: input, shape index: {}]
  %s4 = inlined_call_operand.hbm [shape: f32[2,128], index: 4, kind: output, shape index: {}]
  %s5 = sld [smem:[#allocation0]]
  $region34: #{imagenetx_forward.1} parent=0
    _
  %s7 = ssub.s32 1, %s5
  %s8 = scalar_select 0, %s7, %s5
  $region1: #{imagenetx_forward.1} parent=0
    #allocation3 [shape = 'u8[1024]{0}', space=vmem, size = 0x400, scoped, tag = 'output window, operand 0, single buffered']
    #allocation4 [shape = 's32[1]{0}', space=sflag, size = 0x4, scoped, tag = 'scoped memory for imagenetx_forward.1']
    %9 = vsyncpa [#allocation4], 0
    // Predicated region
    $region2: #{imagenetx_forward.1} parent=1 // pred_check
      _
    $region3: #{imagenetx_forward.1} parent=1 // pred_check_branch
      %11 = sbr.rel (0) target = $region5
    $region4: #{imagenetx_forward.1} parent=1 // pred_region
      _
    $region5: #{imagenetx_forward.1} parent=1 // pred_fallthru
      _
    // Predicated region
    $region6: #{imagenetx_forward.1} parent=1 // pred_check
      _
    $region7: #{imagenetx_forward.1} parent=1 // pred_check_branch
      %13 = sbr.rel (0) target = $region9
    $region8: #{imagenetx_forward.1} parent=1 // pred_region
      _
    $region9: #{imagenetx_forward.1} parent=1 // pred_fallthru
      _
    // Predicated region
    $region10: #{imagenetx_forward.1} parent=1 // pred_check
      _
    $region11: #{imagenetx_forward.1} parent=1 // pred_check_branch
      %15 = sbr.rel (0) target = $region13
    $region12: #{imagenetx_forward.1} parent=1 // pred_region
      _
    $region13: #{imagenetx_forward.1} parent=1 // pred_fallthru
      _
    // Predicated region
    $region14: #{imagenetx_forward.1} parent=1 // pred_check
      _
    $region15: #{imagenetx_forward.1} parent=1 // pred_check_branch
      %17 = sbr.rel (0) target = $region17
    $region16: #{imagenetx_forward.1} parent=1 // pred_region
      _
    $region17: #{imagenetx_forward.1} parent=1 // pred_fallthru
      _
    %p18 = scmp.eq.s32.totalorder 0, 0
    // Predicated region
    $region18: #{imagenetx_forward.1} parent=1 // pred_check
      %p19 = pneg %p18
    $region19: #{imagenetx_forward.1} parent=1 // pred_check_branch
      %21 = sbr.rel (%p19) target = $region21
    $region20: #{imagenetx_forward.1} parent=1 // pred_region
      %22 = vst [vmem:[#allocation2] sm:$0xff] 0.0
    $region21: #{imagenetx_forward.1} parent=1 // pred_fallthru
      _
    %v23 = vld [vmem:[%s0] sm:$0xff]
    %v24 = vadd.f32 %v23, 0.0
    %v25 = vld [vmem:[%s0 + $0x8] sm:$0xff]
    %v26 = vadd.f32 %v24, %v25
    %v27 = vld [vmem:[#allocation2] sm:$0xff]
    %v28 = vadd.f32 %v27, %v26
    %29 = vst [vmem:[#allocation2] sm:$0xff] %v28
    // Predicated region
    $region22: #{imagenetx_forward.1} parent=1 // pred_check
      %p30 = pneg %p18
    $region23: #{imagenetx_forward.1} parent=1 // pred_check_branch
      %32 = sbr.rel (%p30) target = $region25
    $region24: #{imagenetx_forward.1} parent=1 // pred_region
      %v33 = vld [vmem:[#allocation2] sm:$0xff]
      %34 = vadd.xlane.f32.xlu0 %v33
      %v35 = vpop.xlane.xlu0 %34
      %v36 = vld [vmem:[%s2] sm:$0xff]
      %v37 = vmul.f32 %v35, %v36
      %v38 = vld [vmem:[%s1] sm:$0x3]
      %v39 = vld [vmem:[%s3] sm:$0x1]
      %v41 = vperm.slane %v39, 0
      %vm43 = vcmask 64512
      %v45 = vsel %vm43, %v38, 0
      %47 = vmatpush.msra.mxu0 0.0
      %48 = vmatpush.msra.mxu0 0.0
      %49 = vmatpush.msra.mxu0 0.0
      %50 = vmatpush.msra.mxu0 0.0
      %51 = vmatpush.msra.mxu0 0.0
      %52 = vmatpush.msra.mxu0 0.0
      %53 = vmatpush.msra.mxu0 0.0
      %54 = vmatpush.msra.mxu0 0.0
      %55 = vmatpush.msra.mxu0 0.0
      %56 = vmatpush.msra.mxu0 0.0
      %57 = vmatpush.msra.mxu0 0.0
      %58 = vmatpush.msra.mxu0 0.0
      %59 = vmatpush.msra.mxu0 0.0
      %60 = vmatpush.msra.mxu0 0.0
      %61 = vmatpush.msra.mxu0 0.0
      %62 = vmatpush.msra.mxu0 %v37
      %63 = vmatmul.f32.gmra.mxu0 %v45
      %v64 = vpop.f32.mrf.mxu0
      %v65 = vadd.f32 %v41, %v64
      %66 = vdwg.mxu0
      %67 = vst [vmem:[#allocation3] sm:$0x3] %v65
    $region25: #{imagenetx_forward.1} parent=1 // pred_fallthru
      _
    // Predicated region
    $region26: #{imagenetx_forward.1} parent=1 // pred_check
      _
    $region27: #{imagenetx_forward.1} parent=1 // pred_check_branch
      %69 = sbr.rel (0) target = $region29
    $region28: #{imagenetx_forward.1} parent=1 // pred_region
      %71 = vsyncadd [#allocation4], 0
      %s73 = sshll.u32 [#allocation3], 4
      %s74 = int_to_ptr.vmem [resolvable:$true] %s73
      %s75 = sshll.u32 %s4, 4
      %s76 = int_to_ptr.hbm [resolvable:$true] %s75
      %78 = dma.vmem_to_hbm [thread:$0]  %s74, 32, %s76, [#allocation4]
    $region29: #{imagenetx_forward.1} parent=1 // pred_fallthru
      _
    // Predicated region
    $region30: #{imagenetx_forward.1} parent=1 // pred_check
      _
    $region31: #{imagenetx_forward.1} parent=1 // pred_check_branch
      %80 = sbr.rel (0) target = $region33
    $region32: #{imagenetx_forward.1} parent=1 // pred_region
      %82 = dma.done [#allocation4], 32
    $region33: #{imagenetx_forward.1} parent=1 // pred_fallthru
      _
    %83 = vsyncpa [#allocation4], 1

</llo_original>
